<compile_context>
chip_gen: v5e
topology: v5e:2x2
jax: 0.10.0
libtpu: 0.0.40
codegen_flags: <defaults>
</compile_context>

<pallas_src>
import functools

import jax
import jax.numpy as jnp
from jax.experimental import pallas as pl
from jax.experimental.pallas import tpu as pltpu


def _round8(x):
    return ((x + 7) // 8) * 8


def _slab_layout(in_channels, node_num):
    """Row layout of the single packed weight slab.

    Every segment starts on an 8-row (sublane-tile) boundary so the in-kernel
    static ref slices stay sublane-aligned.  Columns [0, cols) of each segment
    hold the tensor, the rest is zero padding.
    """
    C = in_channels
    Cf = 2 * C
    NN = node_num
    entries = [
        ("wp",       C,      C),      # invertible 1x1 conv weight
        ("wf1",      NN,     C),      # FT layer 1
        ("wf2",      Cf,     NN),     # FT layer 2
        ("w_ft_all", 4 * C,  Cf),     # [wa_s; wa_l; wcf_s; wcf_l]  (shared RHS = ft)
        ("w_z_all",  2 * C,  C),      # [wcz_s; wcz_l]              (shared RHS = z)
        ("an_bias",  C,      1),
        ("an_logs",  C,      1),
        ("bf1",      NN,     1),
        ("bf2",      Cf,     1),
        ("ba_s",     C,      1),
        ("ba_l",     C,      1),
        ("bc_s",     C,      1),
        ("bc_l",     C,      1),
    ]
    layout = {}
    row = 0
    lanes = 1
    for name, r, c in entries:
        layout[name] = (row, r, c)
        row += _round8(r)
        lanes = max(lanes, c)
    return layout, _round8(row), lanes


def _pack_slab(tensors, layout, total_rows, lanes):
    slab = jnp.zeros((total_rows, lanes), jnp.float32)
    for name, (r0, r, c) in layout.items():
        slab = slab.at[r0:r0 + r, 0:c].set(tensors[name].astype(jnp.float32))
    return slab


def _log_sigmoid(x):
    # Numerically safe log(sigmoid(x)): avoids log(0) = -inf for x << 0.
    # Written with min/abs/exp/log only so it lowers cleanly in Mosaic.
    return jnp.minimum(x, 0.0) - jnp.log(1.0 + jnp.exp(-jnp.abs(x)))


def _flow_cell_kernel(z_ref, lr_ref, slab_ref, zout_ref, ld_ref, *,
                      layout, C, HW, samples_per_block):
    def w(name):
        r0, r, c = layout[name]
        return slab_ref[r0:r0 + r, 0:c]          # static ref slice -> small load

    z = z_ref[...]            # (C, lanes) f32, lanes = samples_per_block * HW
    lr = lr_ref[...]          # (C, lanes) f32

    # --- ActNorm2d (its data-independent logdet term is added in the wrapper).
    z = (z + w("an_bias")) * jnp.exp(w("an_logs"))

    # --- InvertibleConv1x1: 1x1 conv == channel matmul.
    # NOTE: at C=4 the MXU issue is mostly padding; an unrolled VPU
    # broadcast-MAC (sum_k wp[:, k:k+1] * z[k:k+1, :]) is the candidate
    # alternative -- kept on the MXU here; benchmark both if C stays tiny.
    z = jnp.dot(w("wp"), z, preferred_element_type=jnp.float32)

    # --- FT(lr): conditioning features.
    h1 = jnp.maximum(
        jnp.dot(w("wf1"), lr, preferred_element_type=jnp.float32) + w("bf1"), 0.0)
    ft = jnp.tanh(
        jnp.dot(w("wf2"), h1, preferred_element_type=jnp.float32) + w("bf2"))

    # --- One fused dot for everything that consumes ft.
    p_ft = jnp.dot(w("w_ft_all"), ft, preferred_element_type=jnp.float32)   # (4C, lanes)
    shift_a = p_ft[0:C] + w("ba_s")
    pre_a = p_ft[C:2 * C] + w("ba_l") + 2.0
    cf_s = p_ft[2 * C:3 * C]
    cf_l = p_ft[3 * C:4 * C]

    # --- SparseAffineHR: affine injector conditioned on ft.
    z = (z + shift_a) * jax.nn.sigmoid(pre_a)
    ld_map = _log_sigmoid(pre_a)                                            # (C, lanes)

    # --- CondSparseAffineHR: coupling on the 2nd channel half.  Both z
    #     projections share RHS z -> one fused dot (the wcz_* columns of the
    #     updated half are zero, so shift/scale depend only on the kept half).
    q_z = jnp.dot(w("w_z_all"), z, preferred_element_type=jnp.float32)      # (2C, lanes)
    h_s = q_z[0:C] + cf_s + w("bc_s")
    pre_c = q_z[C:2 * C] + cf_l + w("bc_l") + 2.0
    row = jax.lax.broadcasted_iota(jnp.int32, z.shape, 0)
    upd = row >= (C // 2)
    z = (z + jnp.where(upd, h_s, 0.0)) * jnp.where(upd, jax.nn.sigmoid(pre_c), 1.0)
    ld_map = ld_map + jnp.where(upd, _log_sigmoid(pre_c), 0.0)

    zout_ref[...] = z

    # --- Per-sample logdet: the lane block holds whole samples, so reduce each
    #     HW-wide lane segment and park sample s at lane s of the output row.
    lane = jax.lax.broadcasted_iota(jnp.int32, (1, 1, 128), 2)
    out_row = jnp.zeros((1, 1, 128), jnp.float32)
    for s in range(samples_per_block):
        ld_s = jnp.sum(ld_map[:, s * HW:(s + 1) * HW])
        out_row = jnp.where(lane == s, ld_s, out_row)
    ld_ref[...] = out_row


def init_params(key, node_num, in_channels):
    C = in_channels
    Cf = 2 * C
    keys = iter(jax.random.split(key, 24))

    def nrm(shape, scale=0.1):
        return scale * jax.random.normal(next(keys), shape, jnp.float32)

    # Orthogonal init for the invertible 1x1 conv weight (as in Glow).
    wp, _ = jnp.linalg.qr(jax.random.normal(next(keys), (C, C), jnp.float32))

    half = C // 2
    params = dict(
        an_bias=nrm((C, 1)),
        an_logs=nrm((C, 1)),
        wp=wp.astype(jnp.float32),
        wf1=nrm((node_num, C)), bf1=nrm((node_num, 1)),
        wf2=nrm((Cf, node_num)), bf2=nrm((Cf, 1)),
        wa_s=nrm((C, Cf)), ba_s=nrm((C, 1)),
        wa_l=nrm((C, Cf)), ba_l=nrm((C, 1)),
        wcz_s=jnp.concatenate(
            [nrm((C, half)), jnp.zeros((C, C - half), jnp.float32)], axis=1),
        wcf_s=nrm((C, Cf)), bc_s=nrm((C, 1)),
        wcz_l=jnp.concatenate(
            [nrm((C, half)), jnp.zeros((C, C - half), jnp.float32)], axis=1),
        wcf_l=nrm((C, Cf)), bc_l=nrm((C, 1)),
    )
    return params


@jax.jit
def flow_cell_forward(z_nchw, lr_nchw, params):
    N, C, H, W = z_nchw.shape
    HW = H * W
    NN = params["wf1"].shape[0]

    # Layout plumbing: channels -> sublanes, batch*spatial -> lanes.
    z2 = z_nchw.astype(jnp.float32).reshape(N, C, HW).transpose(1, 0, 2).reshape(C, N * HW)
    lr2 = lr_nchw.astype(jnp.float32).reshape(N, C, HW).transpose(1, 0, 2).reshape(C, N * HW)

    # Lane blocking: whole samples per block; 2 "parallel" blocks when the
    # batch allows it (keeps v7x's 2nd TensorCore busy; a trivial 2-step loop
    # on v5e / v6e).  Split further only if a block would get very wide.
    num_blocks = 2 if (N % 2 == 0) else 1
    spb = N // num_blocks
    while spb % 2 == 0 and spb * HW > 4096:
        num_blocks *= 2
        spb //= 2
    lanes_per_block = spb * HW

    # Fuse shared-RHS weights and pack all parameters into one VMEM slab.
    p = params
    tensors = dict(
        wp=p["wp"], wf1=p["wf1"], wf2=p["wf2"],
        w_ft_all=jnp.concatenate([p["wa_s"], p["wa_l"], p["wcf_s"], p["wcf_l"]], axis=0),
        w_z_all=jnp.concatenate([p["wcz_s"], p["wcz_l"]], axis=0),
        an_bias=p["an_bias"], an_logs=p["an_logs"],
        bf1=p["bf1"], bf2=p["bf2"],
        ba_s=p["ba_s"], ba_l=p["ba_l"], bc_s=p["bc_s"], bc_l=p["bc_l"],
    )
    layout, slab_rows, slab_lanes = _slab_layout(C, NN)
    slab = _pack_slab(tensors, layout, slab_rows, slab_lanes)

    kernel = functools.partial(_flow_cell_kernel, layout=layout, C=C, HW=HW,
                               samples_per_block=spb)

    z_out2, ld_rows = pl.pallas_call(
        kernel,
        grid=(num_blocks,),
        in_specs=[
            pl.BlockSpec((C, lanes_per_block), lambda i: (0, i)),
            pl.BlockSpec((C, lanes_per_block), lambda i: (0, i)),
            pl.BlockSpec((slab_rows, slab_lanes), lambda i: (0, 0)),
        ],
        out_specs=[
            pl.BlockSpec((C, lanes_per_block), lambda i: (0, i)),
            pl.BlockSpec((1, 1, 128), lambda i: (i, 0, 0)),
        ],
        out_shape=[
            jax.ShapeDtypeStruct((C, N * HW), jnp.float32),
            jax.ShapeDtypeStruct((num_blocks, 1, 128), jnp.float32),
        ],
        compiler_params=pltpu.CompilerParams(
            dimension_semantics=("parallel",)),
    )(z2, lr2, slab)

    # Data-independent logdet terms: ActNorm H*W*sum(logs) and the invertible
    # 1x1 conv's H*W*log|det W| (jnp.linalg.slogdet has no Pallas equivalent).
    _, wp_logabsdet = jnp.linalg.slogdet(p["wp"].astype(jnp.float32))
    const_ld = jnp.float32(HW) * (jnp.sum(p["an_logs"]) + wp_logabsdet)

    logdet = ld_rows[:, 0, :spb].reshape(N) + const_ld
    z_out = z_out2.reshape(C, N, HW).transpose(1, 0, 2).reshape(N, C, H, W)
    return z_out, logdet


def flow_cell_reference(z_nchw, lr_nchw, params):
    """Pure-JAX reference with identical semantics (high-precision matmuls)."""
    N, C, H, W = z_nchw.shape
    HW = H * W
    hi = jax.lax.Precision.HIGHEST
    p = params
    z = z_nchw.astype(jnp.float32).reshape(N, C, HW)
    lr = lr_nchw.astype(jnp.float32).reshape(N, C, HW)

    z = (z + p["an_bias"]) * jnp.exp(p["an_logs"])
    logdet = jnp.zeros((N,), jnp.float32) + HW * jnp.sum(p["an_logs"])

    z = jnp.einsum("oc,nch->noh", p["wp"], z, precision=hi)
    logdet = logdet + HW * jnp.linalg.slogdet(p["wp"])[1]

    h1 = jax.nn.relu(jnp.einsum("oc,nch->noh", p["wf1"], lr, precision=hi) + p["bf1"])
    ft = jnp.tanh(jnp.einsum("oc,nch->noh", p["wf2"], h1, precision=hi) + p["bf2"])

    shift_a = jnp.einsum("oc,nch->noh", p["wa_s"], ft, precision=hi) + p["ba_s"]
    pre_a = jnp.einsum("oc,nch->noh", p["wa_l"], ft, precision=hi) + p["ba_l"] + 2.0
    z = (z + shift_a) * jax.nn.sigmoid(pre_a)
    logdet = logdet + jnp.sum(jax.nn.log_sigmoid(pre_a), axis=(1, 2))

    h_s = (jnp.einsum("oc,nch->noh", p["wcz_s"], z, precision=hi)
           + jnp.einsum("oc,nch->noh", p["wcf_s"], ft, precision=hi) + p["bc_s"])
    pre_c = (jnp.einsum("oc,nch->noh", p["wcz_l"], z, precision=hi)
             + jnp.einsum("oc,nch->noh", p["wcf_l"], ft, precision=hi) + p["bc_l"] + 2.0)
    upd = (jnp.arange(C) >= C // 2)[None, :, None]
    z = (z + jnp.where(upd, h_s, 0.0)) * jnp.where(upd, jax.nn.sigmoid(pre_c), 1.0)
    logdet = logdet + jnp.sum(jnp.where(upd, jax.nn.log_sigmoid(pre_c), 0.0), axis=(1, 2))
    return z.reshape(N, C, H, W), logdet


if __name__ == "__main__":
    N, C, H, W = 2, 4, 16, 16
    node_num = 16

    key = jax.random.PRNGKey(0)
    kz, klr = jax.random.split(key, 2)
    z = jax.random.normal(kz, (N, C, H, W), jnp.float32)
    # TODO(synk): the original forward takes lr_list (a list of LR tensors);
    # this synthetic setup uses a single conditioning tensor of the same shape.
    lr = jax.random.normal(klr, (N, C, H, W), jnp.float32)

    params = init_params(jax.random.PRNGKey(42), node_num, C)

    z_out, logdet = flow_cell_forward(z, lr, params)
    jax.block_until_ready((z_out, logdet))

    z_ref, ld_ref = flow_cell_reference(z, lr, params)
    jax.block_until_ready((z_ref, ld_ref))

    assert z_out.shape == (N, C, H, W) and z_out.dtype == jnp.float32
    assert logdet.shape == (N,)
    assert bool(jnp.all(jnp.isfinite(z_out))) and bool(jnp.all(jnp.isfinite(logdet)))
    assert bool(jnp.allclose(z_out, z_ref, atol=2e-2, rtol=2e-2)), "z mismatch vs reference"
    assert bool(jnp.allclose(logdet, ld_ref, atol=1.0, rtol=1e-2)), "logdet mismatch vs reference"
    print("KERNEL_OK")
</pallas_src>

<mosaic_0001>
module attributes {stable_mosaic.version = 11 : i64} {
  func.func @_flow_cell_kernel(%arg0: i32, %arg1: memref<4x256xf32, #tpu.memory_space<vmem>>, %arg2: memref<4x256xf32, #tpu.memory_space<vmem>>, %arg3: memref<128x16xf32, #tpu.memory_space<vmem>>, %arg4: memref<4x256xf32, #tpu.memory_space<vmem>>, %arg5: memref<1x1x128xf32, #tpu.memory_space<vmem>>) attributes {dimension_semantics = [#tpu.dimension_semantics<parallel>], iteration_bounds = array<i64: 2>, scalar_prefetch = 0 : i64, scratch_operands = 0 : i64, tpu.core_type = #tpu.core_type<tc>, window_params = [{transform_indices = @transform_0, window_bounds = array<i64: 4, 256>}, {transform_indices = @transform_1, window_bounds = array<i64: 4, 256>}, {pipeline_mode = #tpu.pipeline_mode<synchronous>, transform_indices = @transform_2, window_bounds = array<i64: 128, 16>}, {transform_indices = @transform_3, window_bounds = array<i64: 4, 256>}, {transform_indices = @transform_4, window_bounds = array<i64: 1, 1, 128>}]} {
    %c0 = arith.constant 0 : index
    %c0_0 = arith.constant 0 : index
    %0 = vector.load %arg1[%c0, %c0_0] : memref<4x256xf32, #tpu.memory_space<vmem>>, vector<4x256xf32>
    %c0_1 = arith.constant 0 : index
    %c0_2 = arith.constant 0 : index
    %1 = vector.load %arg2[%c0_1, %c0_2] : memref<4x256xf32, #tpu.memory_space<vmem>>, vector<4x256xf32>
    %c56 = arith.constant 56 : index
    %c0_3 = arith.constant 0 : index
    %2 = vector.load %arg3[%c56, %c0_3] : memref<128x16xf32, #tpu.memory_space<vmem>>, vector<4x1xf32>
    %3 = vector.broadcast %2 : vector<4x1xf32> to vector<4x256xf32>
    %4 = arith.addf %0, %3 : vector<4x256xf32>
    %c64 = arith.constant 64 : index
    %c0_4 = arith.constant 0 : index
    %5 = vector.load %arg3[%c64, %c0_4] : memref<128x16xf32, #tpu.memory_space<vmem>>, vector<4x1xf32>
    %6 = math.exp %5 : vector<4x1xf32>
    %7 = vector.broadcast %6 : vector<4x1xf32> to vector<4x256xf32>
    %8 = arith.mulf %4, %7 : vector<4x256xf32>
    %c0_5 = arith.constant 0 : index
    %c0_6 = arith.constant 0 : index
    %9 = vector.load %arg3[%c0_5, %c0_6] : memref<128x16xf32, #tpu.memory_space<vmem>>, vector<4x4xf32>
    %cst = arith.constant dense<0.000000e+00> : vector<4x256xf32>
    %10 = tpu.matmul %9, %8, %cst {dimension_numbers = #tpu.dot_dimension_numbers<[1], [0], [0], [1], [0, 0, 1, 1], [], []>} : vector<4x4xf32>, vector<4x256xf32>, vector<4x256xf32> -> vector<4x256xf32>
    %c8 = arith.constant 8 : index
    %c0_7 = arith.constant 0 : index
    %11 = vector.load %arg3[%c8, %c0_7] : memref<128x16xf32, #tpu.memory_space<vmem>>, vector<16x4xf32>
    %cst_8 = arith.constant dense<0.000000e+00> : vector<16x256xf32>
    %12 = tpu.matmul %11, %1, %cst_8 {dimension_numbers = #tpu.dot_dimension_numbers<[1], [0], [0], [1], [0, 0, 1, 1], [], []>} : vector<16x4xf32>, vector<4x256xf32>, vector<16x256xf32> -> vector<16x256xf32>
    %c72 = arith.constant 72 : index
    %c0_9 = arith.constant 0 : index
    %13 = vector.load %arg3[%c72, %c0_9] : memref<128x16xf32, #tpu.memory_space<vmem>>, vector<16x1xf32>
    %14 = vector.broadcast %13 : vector<16x1xf32> to vector<16x256xf32>
    %15 = arith.addf %12, %14 : vector<16x256xf32>
    %cst_10 = arith.constant 0.000000e+00 : f32
    %16 = vector.broadcast %cst_10 : f32 to vector<16x256xf32>
    %17 = arith.maximumf %15, %16 : vector<16x256xf32>
    %c24 = arith.constant 24 : index
    %c0_11 = arith.constant 0 : index
    %18 = vector.load %arg3[%c24, %c0_11] : memref<128x16xf32, #tpu.memory_space<vmem>>, vector<8x16xf32>
    %cst_12 = arith.constant dense<0.000000e+00> : vector<8x256xf32>
    %19 = tpu.matmul %18, %17, %cst_12 {dimension_numbers = #tpu.dot_dimension_numbers<[1], [0], [0], [1], [0, 0, 1, 1], [], []>} : vector<8x16xf32>, vector<16x256xf32>, vector<8x256xf32> -> vector<8x256xf32>
    %c88 = arith.constant 88 : index
    %c0_13 = arith.constant 0 : index
    %20 = vector.load %arg3[%c88, %c0_13] : memref<128x16xf32, #tpu.memory_space<vmem>>, vector<8x1xf32>
    %21 = vector.broadcast %20 : vector<8x1xf32> to vector<8x256xf32>
    %22 = arith.addf %19, %21 : vector<8x256xf32>
    %23 = math.tanh %22 : vector<8x256xf32>
    %c32 = arith.constant 32 : index
    %c0_14 = arith.constant 0 : index
    %24 = vector.load %arg3[%c32, %c0_14] : memref<128x16xf32, #tpu.memory_space<vmem>>, vector<16x8xf32>
    %cst_15 = arith.constant dense<0.000000e+00> : vector<16x256xf32>
    %25 = tpu.matmul %24, %23, %cst_15 {dimension_numbers = #tpu.dot_dimension_numbers<[1], [0], [0], [1], [0, 0, 1, 1], [], []>} : vector<16x8xf32>, vector<8x256xf32>, vector<16x256xf32> -> vector<16x256xf32>
    %26 = vector.extract_strided_slice %25 {offsets = [0, 0], sizes = [4, 256], strides = [1, 1]} : vector<16x256xf32> to vector<4x256xf32>
    %c96 = arith.constant 96 : index
    %c0_16 = arith.constant 0 : index
    %27 = vector.load %arg3[%c96, %c0_16] : memref<128x16xf32, #tpu.memory_space<vmem>>, vector<4x1xf32>
    %28 = vector.broadcast %27 : vector<4x1xf32> to vector<4x256xf32>
    %29 = arith.addf %26, %28 : vector<4x256xf32>
    %30 = vector.extract_strided_slice %25 {offsets = [4, 0], sizes = [4, 256], strides = [1, 1]} : vector<16x256xf32> to vector<4x256xf32>
    %c104 = arith.constant 104 : index
    %c0_17 = arith.constant 0 : index
    %31 = vector.load %arg3[%c104, %c0_17] : memref<128x16xf32, #tpu.memory_space<vmem>>, vector<4x1xf32>
    %32 = vector.broadcast %31 : vector<4x1xf32> to vector<4x256xf32>
    %33 = arith.addf %30, %32 : vector<4x256xf32>
    %cst_18 = arith.constant 2.000000e+00 : f32
    %34 = vector.broadcast %cst_18 : f32 to vector<4x256xf32>
    %35 = arith.addf %33, %34 : vector<4x256xf32>
    %36 = vector.extract_strided_slice %25 {offsets = [8, 0], sizes = [4, 256], strides = [1, 1]} : vector<16x256xf32> to vector<4x256xf32>
    %37 = vector.extract_strided_slice %25 {offsets = [12, 0], sizes = [4, 256], strides = [1, 1]} : vector<16x256xf32> to vector<4x256xf32>
    %38 = arith.addf %10, %29 : vector<4x256xf32>
    %39 = arith.negf %35 : vector<4x256xf32>
    %40 = math.exp %39 : vector<4x256xf32>
    %cst_19 = arith.constant 1.000000e+00 : f32
    %41 = vector.broadcast %cst_19 : f32 to vector<4x256xf32>
    %42 = arith.addf %41, %40 : vector<4x256xf32>
    %43 = arith.divf %41, %42 : vector<4x256xf32>
    %44 = arith.mulf %38, %43 : vector<4x256xf32>
    %cst_20 = arith.constant 0.000000e+00 : f32
    %45 = vector.broadcast %cst_20 : f32 to vector<4x256xf32>
    %46 = arith.minimumf %35, %45 : vector<4x256xf32>
    %47 = math.absf %35 : vector<4x256xf32>
    %cst_21 = arith.constant 0.000000e+00 : f32
    %48 = vector.broadcast %cst_21 : f32 to vector<4x256xf32>
    %49 = arith.subf %48, %47 : vector<4x256xf32>
    %50 = math.exp %49 : vector<4x256xf32>
    %cst_22 = arith.constant 1.000000e+00 : f32
    %51 = vector.broadcast %cst_22 : f32 to vector<4x256xf32>
    %52 = arith.addf %51, %50 : vector<4x256xf32>
    %53 = math.log %52 : vector<4x256xf32>
    %54 = arith.subf %46, %53 : vector<4x256xf32>
    %c48 = arith.constant 48 : index
    %c0_23 = arith.constant 0 : index
    %55 = vector.load %arg3[%c48, %c0_23] : memref<128x16xf32, #tpu.memory_space<vmem>>, vector<8x4xf32>
    %cst_24 = arith.constant dense<0.000000e+00> : vector<8x256xf32>
    %56 = tpu.matmul %55, %44, %cst_24 {dimension_numbers = #tpu.dot_dimension_numbers<[1], [0], [0], [1], [0, 0, 1, 1], [], []>} : vector<8x4xf32>, vector<4x256xf32>, vector<8x256xf32> -> vector<8x256xf32>
    %57 = vector.extract_strided_slice %56 {offsets = [0, 0], sizes = [4, 256], strides = [1, 1]} : vector<8x256xf32> to vector<4x256xf32>
    %58 = arith.addf %57, %36 : vector<4x256xf32>
    %c112 = arith.constant 112 : index
    %c0_25 = arith.constant 0 : index
    %59 = vector.load %arg3[%c112, %c0_25] : memref<128x16xf32, #tpu.memory_space<vmem>>, vector<4x1xf32>
    %60 = vector.broadcast %59 : vector<4x1xf32> to vector<4x256xf32>
    %61 = arith.addf %58, %60 : vector<4x256xf32>
    %62 = vector.extract_strided_slice %56 {offsets = [4, 0], sizes = [4, 256], strides = [1, 1]} : vector<8x256xf32> to vector<4x256xf32>
    %63 = arith.addf %62, %37 : vector<4x256xf32>
    %c120 = arith.constant 120 : index
    %c0_26 = arith.constant 0 : index
    %64 = vector.load %arg3[%c120, %c0_26] : memref<128x16xf32, #tpu.memory_space<vmem>>, vector<4x1xf32>
    %65 = vector.broadcast %64 : vector<4x1xf32> to vector<4x256xf32>
    %66 = arith.addf %63, %65 : vector<4x256xf32>
    %cst_27 = arith.constant 2.000000e+00 : f32
    %67 = vector.broadcast %cst_27 : f32 to vector<4x256xf32>
    %68 = arith.addf %66, %67 : vector<4x256xf32>
    %69 = tpu.iota {dimensions = array<i32: 0>} : vector<4x256xi32>
    %c2_i32 = arith.constant 2 : i32
    %70 = vector.broadcast %c2_i32 : i32 to vector<4x256xi32>
    %71 = arith.cmpi sge, %69, %70 : vector<4x256xi32>
    %cst_28 = arith.constant 0.000000e+00 : f32
    %72 = vector.broadcast %cst_28 : f32 to vector<4x256xf32>
    %73 = arith.select %71, %61, %72 : vector<4x256xi1>, vector<4x256xf32>
    %74 = arith.addf %44, %73 : vector<4x256xf32>
    %75 = arith.negf %68 : vector<4x256xf32>
    %76 = math.exp %75 : vector<4x256xf32>
    %cst_29 = arith.constant 1.000000e+00 : f32
    %77 = vector.broadcast %cst_29 : f32 to vector<4x256xf32>
    %78 = arith.addf %77, %76 : vector<4x256xf32>
    %79 = arith.divf %77, %78 : vector<4x256xf32>
    %cst_30 = arith.constant 1.000000e+00 : f32
    %80 = vector.broadcast %cst_30 : f32 to vector<4x256xf32>
    %81 = arith.select %71, %79, %80 : vector<4x256xi1>, vector<4x256xf32>
    %82 = arith.mulf %74, %81 : vector<4x256xf32>
    %cst_31 = arith.constant 0.000000e+00 : f32
    %83 = vector.broadcast %cst_31 : f32 to vector<4x256xf32>
    %84 = arith.minimumf %68, %83 : vector<4x256xf32>
    %85 = math.absf %68 : vector<4x256xf32>
    %cst_32 = arith.constant 0.000000e+00 : f32
    %86 = vector.broadcast %cst_32 : f32 to vector<4x256xf32>
    %87 = arith.subf %86, %85 : vector<4x256xf32>
    %88 = math.exp %87 : vector<4x256xf32>
    %cst_33 = arith.constant 1.000000e+00 : f32
    %89 = vector.broadcast %cst_33 : f32 to vector<4x256xf32>
    %90 = arith.addf %89, %88 : vector<4x256xf32>
    %91 = math.log %90 : vector<4x256xf32>
    %92 = arith.subf %84, %91 : vector<4x256xf32>
    %cst_34 = arith.constant 0.000000e+00 : f32
    %93 = vector.broadcast %cst_34 : f32 to vector<4x256xf32>
    %94 = arith.select %71, %92, %93 : vector<4x256xi1>, vector<4x256xf32>
    %95 = arith.addf %54, %94 : vector<4x256xf32>
    %c0_35 = arith.constant 0 : index
    %c0_36 = arith.constant 0 : index
    %96 = vector.load %arg4[%c0_35, %c0_36] : memref<4x256xf32, #tpu.memory_space<vmem>>, vector<4x256xf32>
    tpu.vector_store %arg4[%c0_35, %c0_36], %82 {strides = array<i32>} : memref<4x256xf32, #tpu.memory_space<vmem>>, vector<4x256xf32>,
    %97 = tpu.iota {dimensions = array<i32: 2>} : vector<1x1x128xi32>
    %cst_37 = arith.constant 0.000000e+00 : f32
    %98 = vector.broadcast %cst_37 : f32 to vector<1x1x128xf32>
    %99 = vector.shape_cast %95 : vector<4x256xf32> to vector<1x4x256xf32>
    %cst_38 = arith.constant dense<0.000000e+00> : vector<1xf32>
    %100 = vector.multi_reduction <add>, %99, %cst_38 [1, 2] : vector<1x4x256xf32> to vector<1xf32>
    %101 = vector.shape_cast %100 : vector<1xf32> to vector<1x1x1xf32>
    %102 = vector.extract %101[0, 0, 0] : f32 from vector<1x1x1xf32>
    %c0_i32 = arith.constant 0 : i32
    %103 = vector.broadcast %c0_i32 : i32 to vector<1x1x128xi32>
    %104 = arith.cmpi eq, %97, %103 : vector<1x1x128xi32>
    %105 = vector.broadcast %102 : f32 to vector<1x1x128xf32>
    %106 = arith.select %104, %105, %98 : vector<1x1x128xi1>, vector<1x1x128xf32>
    %c0_39 = arith.constant 0 : index
    %c0_40 = arith.constant 0 : index
    %c0_41 = arith.constant 0 : index
    %107 = vector.load %arg5[%c0_39, %c0_40, %c0_41] : memref<1x1x128xf32, #tpu.memory_space<vmem>>, vector<1x1x128xf32>
    tpu.vector_store %arg5[%c0_39, %c0_40, %c0_41], %106 {strides = array<i32>} : memref<1x1x128xf32, #tpu.memory_space<vmem>>, vector<1x1x128xf32>,
    return
  }
  func.func @transform_0(%arg0: i32) -> (i32, i32) {
    %c0_i32 = arith.constant 0 : i32
    %c0_i32_0 = arith.constant 0 : i32
    return %c0_i32, %arg0 : i32, i32
  }
  func.func @transform_1(%arg0: i32) -> (i32, i32) {
    %c0_i32 = arith.constant 0 : i32
    %c0_i32_0 = arith.constant 0 : i32
    return %c0_i32, %arg0 : i32, i32
  }
  func.func @transform_2(%arg0: i32) -> (i32, i32) {
    %c0_i32 = arith.constant 0 : i32
    %c0_i32_0 = arith.constant 0 : i32
    %c0_i32_1 = arith.constant 0 : i32
    return %c0_i32, %c0_i32_0 : i32, i32
  }
  func.func @transform_3(%arg0: i32) -> (i32, i32) {
    %c0_i32 = arith.constant 0 : i32
    %c0_i32_0 = arith.constant 0 : i32
    return %c0_i32, %arg0 : i32, i32
  }
  func.func @transform_4(%arg0: i32) -> (i32, i32, i32) {
    %c0_i32 = arith.constant 0 : i32
    %c0_i32_0 = arith.constant 0 : i32
    %c0_i32_1 = arith.constant 0 : i32
    return %arg0, %c0_i32, %c0_i32_0 : i32, i32, i32
  }
}

</mosaic_0001>

<llo_original>
// kernel: custom-call.2
$region0: #{custom-call.2}
  %s0 = inlined_call_operand.vmem [shape: f32[4,4], index: 0, kind: input, shape index: {}]
  %s1 = inlined_call_operand.vmem [shape: f32[4,4], index: 1, kind: output, shape index: {0}]
  %s2 = inlined_call_operand.hbm [shape: s32[4], index: 2, kind: output, shape index: {1}]
  %s3 = inlined_call_operand.hbm [shape: s32[4], index: 3, kind: output, shape index: {2}]
  %4 = xla_tuple %s1, %s2, %s3
  $region1: #{custom-call.2} parent=0
    #allocation0 [shape = 'u8[4096]{0}', space=vmem, size = 0x1000, scoped, tag = 'operand span for operand 0']
    #allocation1 [shape = 'u8[2048]{0}', space=vmem, size = 0x800, scoped, tag = 'packed  for operand 0']
    #allocation2 [shape = 'u8[4096]{0}', space=vmem, size = 0x1000, scoped, tag = 'operand span for operand 1']
    #allocation3 [shape = 'u8[2048]{0}', space=vmem, size = 0x800, scoped, tag = 'packed  for operand 1']
    #allocation4 [shape = 'u8[4096]{0}', space=vmem, size = 0x1000, scoped, tag = 'operand span for operand 2']
    #allocation5 [shape = 'u8[512]{0}', space=vmem, size = 0x400, scoped, tag = 'packed  for operand 2']
    #allocation6 [shape = 's32[1]{0}', space=sflag, size = 0x4, scoped, tag = 'scoped memory for custom-call.2']
    #allocation7 [shape = 'u8[4096]{0}', space=vmem, size = 0x1000, scoped, tag = 'operand span for operand 3']
    #allocation8 [shape = 'u8[512]{0}', space=vmem, size = 0x400, scoped, tag = 'packed  for operand 3']
    #allocation9 [shape = 's32[1]{0}', space=sflag, size = 0x4, scoped, tag = 'scoped memory for custom-call.2']
    #allocation10 [shape = 's32[4,128]{1,0}', space=vmem, size = 0x1000, scoped, tag = 'scratch for permutations']
    %5 = vsyncpa [#allocation6], 0
    %6 = vsyncpa [#allocation9], 0
    // Predicated region
    $region2: #{custom-call.2} parent=1 // pred_check
      _
    $region3: #{custom-call.2} parent=1 // pred_check_branch
      %8 = sbr.rel (0) target = $region5
    $region4: #{custom-call.2} parent=1 // pred_region
      %p10 = scmp.gt.s32.totalorder 0, 0
      // Predicated region
      $region6: #{custom-call.2} parent=4 // pred_check
        %p11 = pneg %p10
      $region7: #{custom-call.2} parent=4 // pred_check_branch
        %13 = sbr.rel (%p11) target = $region9
      $region8: #{custom-call.2} parent=4 // pred_region
        %s14 = ssub.s32 0, 1
        %s15 = smul.u32 %s14, 8
        %s16 = scalar_lea.vmem %s0, %s15
        %v17 = vld [vmem:[%s0] sm:$0xff]
        // While loop
        $region10: #{custom-call.2} parent=8 // loop_pre_header
          _
        $region11: #{custom-call.2} parent=8 // loop_header
          %s18 = sphi %s0, %s40
          %s19 = sphi [#allocation1], %s41
          %v20 = vphi %v17, %v42
          %s21 = ssub.s32 %s16, 64
          %p22 = scmp.gt.s32.totalorder %s18, %s21
        $region12: #{custom-call.2} parent=8 // loop_header_branch
          %24 = sbr.rel (%p22) target = $region16
        $region13: #{custom-call.2} parent=8 // loop_body
          %25 = vst [vmem:[%s19] sm:$0xff] %v20
          %v26 = vld [vmem:[%s18 + $0x8] sm:$0xff]
          %27 = vst [vmem:[%s19 + $0x8] sm:$0xff] %v26
          %v28 = vld [vmem:[%s18 + $0x10] sm:$0xff]
          %29 = vst [vmem:[%s19 + $0x10] sm:$0xff] %v28
          %v30 = vld [vmem:[%s18 + $0x18] sm:$0xff]
          %31 = vst [vmem:[%s19 + $0x18] sm:$0xff] %v30
          %v32 = vld [vmem:[%s18 + $0x20] sm:$0xff]
          %33 = vst [vmem:[%s19 + $0x20] sm:$0xff] %v32
          %v34 = vld [vmem:[%s18 + $0x28] sm:$0xff]
          %35 = vst [vmem:[%s19 + $0x28] sm:$0xff] %v34
          %v36 = vld [vmem:[%s18 + $0x30] sm:$0xff]
          %37 = vst [vmem:[%s19 + $0x30] sm:$0xff] %v36
          %v38 = vld [vmem:[%s18 + $0x38] sm:$0xff]
          %39 = vst [vmem:[%s19 + $0x38] sm:$0xff] %v38
        $region14: #{custom-call.2} parent=8 // loop_footer
          %s40 = scalar_lea.vmem %s18, 64
          %s41 = scalar_lea.vmem %s19, 64
          %v42 = vld [vmem:[%s18 + $0x40] sm:$0xff]
        $region15: #{custom-call.2} parent=8 // loop_footer_branch
          %43 = sbr.rel target = $region11
        $region16: #{custom-call.2} parent=8 // loop_exit
          _
        // While loop
        $region17: #{custom-call.2} parent=8 // loop_pre_header
          _
        $region18: #{custom-call.2} parent=8 // loop_header
          %s44 = sphi %s18, %s52
          %s45 = sphi %s19, %s53
          %v46 = vphi %v20, %v46
          %p47 = scmp.gt.s32.totalorder %s44, %s16
        $region19: #{custom-call.2} parent=8 // loop_header_branch
          %49 = sbr.rel (%p47) target = $region23
        $region20: #{custom-call.2} parent=8 // loop_body
          %v50 = vld [vmem:[%s44] sm:$0xff]
          %51 = vst [vmem:[%s45] sm:$0xff] %v50
        $region21: #{custom-call.2} parent=8 // loop_footer
          %s52 = scalar_lea.vmem %s44, 8
          %s53 = scalar_lea.vmem %s45, 8
        $region22: #{custom-call.2} parent=8 // loop_footer_branch
          %54 = sbr.rel target = $region18
        $region23: #{custom-call.2} parent=8 // loop_exit
          _
      $region9: #{custom-call.2} parent=4 // pred_fallthru
        _
      %s56 = ssub.s32 16, 1
      %s57 = smul.u32 0, 8
      %s58 = scalar_lea.vmem [#allocation1], %s57
      %s59 = smul.u32 0, 8
      %s60 = scalar_lea.vmem %s0, %s59
      %v61 = vld [vmem:[%s60] sm:%s56]
      %62 = vst [vmem:[%s58] sm:%s56] %v61
    $region5: #{custom-call.2} parent=1 // pred_fallthru
      _
    %s64 = ssub.s32 16, 1
    %v65 = vld [vmem:[#allocation1] sm:%s64]
    %66 = vst [vmem:[#allocation0] sm:%s64] %v65
    %v67 = vld [vmem:[#allocation0] sm:$0xff]
    %68 = vst [vmem:[#allocation2] sm:$0xff] %v67
    %69 = vst [vmem:[#allocation4] sm:$0x1] 0
    %v70 = vlaneseq
    %v71 = vshrl.u32 %v70, 7
    %v72 = vmov %v71
    %74 = vst [vmem:[#allocation10] sm:$0xff] %v72
    loop: start=0, step=1, limit=4
    $region25: #{custom-call.2} parent=1 // loop_pre_header
      _
    $region26: #{custom-call.2} parent=1 // loop_header
      %s76 = sphi 0, %s80
      %p77 = scmp.ge.s32.totalorder %s76, 4
    $region27: #{custom-call.2} parent=1 // loop_header_branch
      %79 = sbr.rel (%p77) target = $region31
    $region28: #{custom-call.2} parent=1 // loop_body
      %v81 = vstv %s76
      %v82 = vlaneseq
      %v83 = vshrl.u32 %v82, 7
      %v84 = vmov %v83
      %v85 = vld [vmem:[#allocation2] sm:$0xff]
      %v86 = vand.u32 2147483647, %v85
      %v88 = vstv %s76
      %vm89 = vcmp.ge.s32.totalorder %v84, %v88
      %vm90 = vcmp.lt.s32.totalorder %v84, 4
      %vm91 = vmand %vm89, %vm90
      %vm92 = vcmp.lt.f32.partialorder -inf, %v86
      %vm93 = vmand %vm91, %vm92
      %v94 = vsel %vm93, %v84, %v81
      %v95 = vsel %vm93, %v86, -inf
      %v96 = vrot.slane %v95, 1
      %v97 = vrot.slane %v94, 1
      %vm98 = vcmp.ge.f32.partialorder %v96, %v95
      %v99 = vsel %vm98, %v96, %v95
      %v100 = vsel %vm98, %v97, %v94
      %v101 = vrot.slane %v96, 1
      %v102 = vrot.slane %v97, 1
      %vm103 = vcmp.ge.f32.partialorder %v101, %v99
      %v104 = vsel %vm103, %v101, %v99
      %v105 = vsel %vm103, %v102, %v100
      %v106 = vrot.slane %v101, 1
      %v107 = vrot.slane %v102, 1
      %vm108 = vcmp.ge.f32.partialorder %v106, %v104
      %v109 = vsel %vm108, %v106, %v104
      %v110 = vsel %vm108, %v107, %v105
      %v111 = vrot.slane %v106, 1
      %v112 = vrot.slane %v107, 1
      %vm113 = vcmp.ge.f32.partialorder %v111, %v109
      %v114 = vsel %vm113, %v111, %v109
      %v115 = vsel %vm113, %v112, %v110
      %v116 = vrot.slane %v111, 1
      %v117 = vrot.slane %v112, 1
      %vm118 = vcmp.ge.f32.partialorder %v116, %v114
      %v119 = vsel %vm118, %v116, %v114
      %v120 = vsel %vm118, %v117, %v115
      %v121 = vrot.slane %v116, 1
      %v122 = vrot.slane %v117, 1
      %vm123 = vcmp.ge.f32.partialorder %v121, %v119
      %v124 = vsel %vm123, %v121, %v119
      %v125 = vsel %vm123, %v122, %v120
      %v126 = vrot.slane %v121, 1
      %v127 = vrot.slane %v122, 1
      %vm128 = vcmp.ge.f32.partialorder %v126, %v124
      %v129 = vsel %vm128, %v126, %v124
      %v130 = vsel %vm128, %v127, %v125
      %s131 = ssub.s32 128, %s76
      %132 = vrot.lane.b32.xlu0 %v130, %s131
      %v133 = vpop.permute.xlu0 %132
      %s134 = vtos %v133
      %v135 = vstv %s76
      %v136 = vlaneseq
      %v137 = vand.u32 %v136, 127
      %vm138 = vcmp.eq.s32.totalorder %v137, %v135
      %v139 = vstv %s134
      %v140 = vld [vmem:[#allocation4] ss:$0 sm:$0xff]
      %v141 = vsel %vm138, %v139, %v140
      %142 = vst [vmem:[#allocation4] sm:$0x1] %v141
      %s143 = scalar_lea.vmem [#allocation2], %s76
      %s144 = scalar_lea.vmem [#allocation2], %s134
      %v145 = vld [vmem:[%s143] ss:$0 sm:$0xff]
      %v146 = vld [vmem:[%s144] ss:$0 sm:$0xff]
      %147 = vst [vmem:[%s144] sm:$0x1] %v145
      %148 = vst [vmem:[%s143] sm:$0x1] %v146
      %s149 = scalar_lea.vmem [#allocation10], %s76
      %s150 = scalar_lea.vmem [#allocation10], %s134
      %v151 = vld [vmem:[%s149] ss:$0 sm:$0xff]
      %v152 = vld [vmem:[%s150] ss:$0 sm:$0xff]
      %153 = vst [vmem:[%s150] sm:$0x1] %v151
      %154 = vst [vmem:[%s149] sm:$0x1] %v152
      %vm155 = vcmp.ne.f32.partialorder %v146, 0.0
      %vm156 = vmand %vm138, %vm155
      %v157 = vsel %vm156, %v146, 1.0
      %v158 = vlaneseq
      %v159 = vand.u32 %v158, 127
      %v160 = vstv %s76
      %vm161 = vcmp.gt.s32.totalorder %v159, %v160
      %v162 = vsel %vm161, %v146, 0.0
      %v163 = vlaneseq
      %v164 = vshrl.u32 %v163, 7
      %v165 = vmov %v164
      %v166 = vld [vmem:[#allocation2] sm:$0xff]
      %v168 = vstv %s76
      %vm169 = vcmp.gt.s32.totalorder %v165, %v168
      %v170 = vsel %vm169, %v157, 1.0
      %v171 = vrcp.pop %v170
      %v172 = vmul.f32 %v170, %v171
      %v173 = vsub.f32 1.0, %v172
      %v174 = vmul.f32 %v171, %v173
      %v175 = vadd.f32 %v171, %v174
      %vm176 = vweird.f32 %v170
      %vm177 = vweird.f32 %v171
      %vm178 = vmor %vm176, %vm177
      %v179 = vsel %vm178, %v171, %v175
      %v180 = vand.u32 2147483647, %v170
      %vm181 = vcmp.eq.f32.partialorder %v180, 8.507059e+37
      %v182 = vand.u32 %v170, 2147483648
      %v183 = vor.u32 1.1754944e-38, %v182
      %v184 = vsel %vm181, %v183, %v179
      %v185 = vmul.f32 %v166, %v184
      %vm186 = vmand %vm169, %vm138
      %v187 = vsel %vm186, %v185, 0.0
      %188 = vadd.xlane.f32.xlu0 %v187
      %v189 = vpop.xlane.xlu0 %188
      %v190 = vmul.f32 %v189, %v162
      %v191 = vsub.f32 %v185, %v190
      %192 = vst [vmem:[#allocation2] sm:$0xff] %v191
    $region29: #{custom-call.2} parent=1 // loop_footer
      %s80 = sadd.s32 1, %s76
    $region30: #{custom-call.2} parent=1 // loop_footer_branch
      %75 = sbr.rel target = $region26
    $region31: #{custom-call.2} parent=1 // loop_exit
      _
    %v193 = vld [vmem:[#allocation10] sm:$0xff]
    %s194 = scalar_lea.vmem [#allocation10], 8
    %s195 = scalar_lea.vmem [#allocation10], 16
    %s196 = scalar_lea.vmem [#allocation10], 24
    %s197 = scalar_lea.vmem [#allocation10], 32
    %s198 = scalar_lea.vmem [#allocation10], 40
    %s199 = scalar_lea.vmem [#allocation10], 48
    %s200 = scalar_lea.vmem [#allocation10], 56
    %s201 = scalar_lea.vmem [#allocation10], 64
    %s202 = scalar_lea.vmem [#allocation10], 72
    %s203 = scalar_lea.vmem [#allocation10], 80
    %s204 = scalar_lea.vmem [#allocation10], 88
    %s205 = scalar_lea.vmem [#allocation10], 96
    %s206 = scalar_lea.vmem [#allocation10], 104
    %s207 = scalar_lea.vmem [#allocation10], 112
    %s208 = scalar_lea.vmem [#allocation10], 120
    %209 = vxpose.xlu0.b32.start [1/16] %v193, 128
    %210 = vxpose.xlu0.b32.cont [2/16] 0, 128
    %211 = vxpose.xlu0.b32.cont [3/16] 0, 128
    %212 = vxpose.xlu0.b32.cont [4/16] 0, 128
    %213 = vxpose.xlu0.b32.cont [5/16] 0, 128
    %214 = vxpose.xlu0.b32.cont [6/16] 0, 128
    %215 = vxpose.xlu0.b32.cont [7/16] 0, 128
    %216 = vxpose.xlu0.b32.cont [8/16] 0, 128
    %217 = vxpose.xlu0.b32.cont [9/16] 0, 128
    %218 = vxpose.xlu0.b32.cont [10/16] 0, 128
    %219 = vxpose.xlu0.b32.cont [11/16] 0, 128
    %220 = vxpose.xlu0.b32.cont [12/16] 0, 128
    %221 = vxpose.xlu0.b32.cont [13/16] 0, 128
    %222 = vxpose.xlu0.b32.cont [14/16] 0, 128
    %223 = vxpose.xlu0.b32.cont [15/16] 0, 128
    %224 = vxpose.xlu0.b32.end [16/16] 0, 128
    %v225 = vpop.trf.xlu0
    %v226 = vpop.trf.xlu0
    %v227 = vpop.trf.xlu0
    %v228 = vpop.trf.xlu0
    %v229 = vpop.trf.xlu0
    %v230 = vpop.trf.xlu0
    %v231 = vpop.trf.xlu0
    %v232 = vpop.trf.xlu0
    %v233 = vpop.trf.xlu0
    %v234 = vpop.trf.xlu0
    %v235 = vpop.trf.xlu0
    %v236 = vpop.trf.xlu0
    %v237 = vpop.trf.xlu0
    %v238 = vpop.trf.xlu0
    %v239 = vpop.trf.xlu0
    %v240 = vpop.trf.xlu0
    %241 = vst [vmem:[#allocation7] sm:$0x1] %v225
    %s243 = ssub.s32 16, 1
    %v244 = vld [vmem:[#allocation2] sm:%s243]
    %s246 = ssub.s32 16, 1
    %247 = vst [vmem:[#allocation3] sm:%s246] %v244
    %s249 = ssub.s32 2, 1
    %v250 = vld [vmem:[#allocation4] sm:%s249]
    %s252 = ssub.s32 2, 1
    %253 = vst [vmem:[#allocation5] sm:%s252] %v250
    %s255 = ssub.s32 2, 1
    %v256 = vld [vmem:[#allocation7] sm:%s255]
    %s258 = ssub.s32 2, 1
    %259 = vst [vmem:[#allocation8] sm:%s258] %v256
    // Predicated region
    $region32: #{custom-call.2} parent=1 // pred_check
      _
    $region33: #{custom-call.2} parent=1 // pred_check_branch
      %261 = sbr.rel (0) target = $region35
    $region34: #{custom-call.2} parent=1 // pred_region
      %p263 = scmp.gt.s32.totalorder 0, 0
      // Predicated region
      $region36: #{custom-call.2} parent=34 // pred_check
        %p264 = pneg %p263
      $region37: #{custom-call.2} parent=34 // pred_check_branch
        %266 = sbr.rel (%p264) target = $region39
      $region38: #{custom-call.2} parent=34 // pred_region
        %s267 = ssub.s32 0, 1
        %s268 = smul.u32 %s267, 8
        %s269 = scalar_lea.vmem [#allocation3], %s268
        %v270 = vld [vmem:[#allocation3] sm:$0xff]
        // While loop
        $region40: #{custom-call.2} parent=38 // loop_pre_header
          _
        $region41: #{custom-call.2} parent=38 // loop_header
          %s271 = sphi [#allocation3], %s293
          %s272 = sphi %s1, %s294
          %v273 = vphi %v270, %v295
          %s274 = ssub.s32 %s269, 64
          %p275 = scmp.gt.s32.totalorder %s271, %s274
        $region42: #{custom-call.2} parent=38 // loop_header_branch
          %277 = sbr.rel (%p275) target = $region46
        $region43: #{custom-call.2} parent=38 // loop_body
          %278 = vst [vmem:[%s272] sm:$0xff] %v273
          %v279 = vld [vmem:[%s271 + $0x8] sm:$0xff]
          %280 = vst [vmem:[%s272 + $0x8] sm:$0xff] %v279
          %v281 = vld [vmem:[%s271 + $0x10] sm:$0xff]
          %282 = vst [vmem:[%s272 + $0x10] sm:$0xff] %v281
          %v283 = vld [vmem:[%s271 + $0x18] sm:$0xff]
          %284 = vst [vmem:[%s272 + $0x18] sm:$0xff] %v283
          %v285 = vld [vmem:[%s271 + $0x20] sm:$0xff]
          %286 = vst [vmem:[%s272 + $0x20] sm:$0xff] %v285
          %v287 = vld [vmem:[%s271 + $0x28] sm:$0xff]
          %288 = vst [vmem:[%s272 + $0x28] sm:$0xff] %v287
          %v289 = vld [vmem:[%s271 + $0x30] sm:$0xff]
          %290 = vst [vmem:[%s272 + $0x30] sm:$0xff] %v289
          %v291 = vld [vmem:[%s271 + $0x38] sm:$0xff]
          %292 = vst [vmem:[%s272 + $0x38] sm:$0xff] %v291
        $region44: #{custom-call.2} parent=38 // loop_footer
          %s293 = scalar_lea.vmem %s271, 64
          %s294 = scalar_lea.vmem %s272, 64
          %v295 = vld [vmem:[%s271 + $0x40] sm:$0xff]
        $region45: #{custom-call.2} parent=38 // loop_footer_branch
          %296 = sbr.rel target = $region41
        $region46: #{custom-call.2} parent=38 // loop_exit
          _
        // While loop
        $region47: #{custom-call.2} parent=38 // loop_pre_header
          _
        $region48: #{custom-call.2} parent=38 // loop_header
          %s297 = sphi %s271, %s305
          %s298 = sphi %s272, %s306
          %v299 = vphi %v273, %v299
          %p300 = scmp.gt.s32.totalorder %s297, %s269
        $region49: #{custom-call.2} parent=38 // loop_header_branch
          %302 = sbr.rel (%p300) target = $region53
        $region50: #{custom-call.2} parent=38 // loop_body
          %v303 = vld [vmem:[%s297] sm:$0xff]
          %304 = vst [vmem:[%s298] sm:$0xff] %v303
        $region51: #{custom-call.2} parent=38 // loop_footer
          %s305 = scalar_lea.vmem %s297, 8
          %s306 = scalar_lea.vmem %s298, 8
        $region52: #{custom-call.2} parent=38 // loop_footer_branch
          %307 = sbr.rel target = $region48
        $region53: #{custom-call.2} parent=38 // loop_exit
          _
      $region39: #{custom-call.2} parent=34 // pred_fallthru
        _
      %s309 = ssub.s32 16, 1
      %s310 = smul.u32 0, 8
      %s311 = scalar_lea.vmem %s1, %s310
      %s312 = smul.u32 0, 8
      %s313 = scalar_lea.vmem [#allocation3], %s312
      %v314 = vld [vmem:[%s313] sm:%s309]
      %315 = vst [vmem:[%s311] sm:%s309] %v314
    $region35: #{custom-call.2} parent=1 // pred_fallthru
      _
    // Predicated region
    $region54: #{custom-call.2} parent=1 // pred_check
      _
    $region55: #{custom-call.2} parent=1 // pred_check_branch
      %317 = sbr.rel (0) target = $region57
    $region56: #{custom-call.2} parent=1 // pred_region
      %319 = vsyncadd [#allocation6], 0
      %s321 = sshll.u32 [#allocation5], 4
      %s322 = int_to_ptr.vmem [resolvable:$true] %s321
      %s323 = sshll.u32 %s2, 4
      %s324 = int_to_ptr.hbm [resolvable:$true] %s323
      %326 = dma.vmem_to_hbm [thread:$0]  %s322, 16, %s324, [#allocation6]
    $region57: #{custom-call.2} parent=1 // pred_fallthru
      _
    // Predicated region
    $region58: #{custom-call.2} parent=1 // pred_check
      _
    $region59: #{custom-call.2} parent=1 // pred_check_branch
      %328 = sbr.rel (0) target = $region61
    $region60: #{custom-call.2} parent=1 // pred_region
      %330 = vsyncadd [#allocation9], 0
      %s332 = sshll.u32 [#allocation8], 4
      %s333 = int_to_ptr.vmem [resolvable:$true] %s332
      %s334 = sshll.u32 %s3, 4
      %s335 = int_to_ptr.hbm [resolvable:$true] %s334
      %337 = dma.vmem_to_hbm [thread:$0]  %s333, 16, %s335, [#allocation9]
    $region61: #{custom-call.2} parent=1 // pred_fallthru
      _
    // Predicated region
    $region62: #{custom-call.2} parent=1 // pred_check
      _
    $region63: #{custom-call.2} parent=1 // pred_check_branch
      %339 = sbr.rel (0) target = $region65
    $region64: #{custom-call.2} parent=1 // pred_region
      %341 = dma.done [#allocation6], 16
    $region65: #{custom-call.2} parent=1 // pred_fallthru
      _
    // Predicated region
    $region66: #{custom-call.2} parent=1 // pred_check
      _
    $region67: #{custom-call.2} parent=1 // pred_check_branch
      %343 = sbr.rel (0) target = $region69
    $region68: #{custom-call.2} parent=1 // pred_region
      %345 = dma.done [#allocation9], 16
    $region69: #{custom-call.2} parent=1 // pred_fallthru
      _
    %346 = vsyncpa [#allocation6], 1
    %347 = vsyncpa [#allocation9], 1

// kernel: flow_cell_forward.1
$region0: #{flow_cell_forward.1}
  #allocation0 [shape = 'u32[]', space=smem, size = 0x4, offset = 0x4, fixed_abs, tag = 'smem constant byte address 0x4 - core index']
  #allocation1 [shape = 'u32[72,128]{1,0:T(1,128)}', space=vmem, size = 0x9000, scoped, tag = 'internal scratch']
  %s0 = inlined_call_operand.vmem [shape: f32[4,512], index: 0, kind: input, shape index: {}]
  %s1 = inlined_call_operand.vmem [shape: f32[4,512], index: 1, kind: input, shape index: {}]
  %s2 = inlined_call_operand.vmem [shape: f32[128,16], index: 2, kind: input, shape index: {}]
  %s3 = inlined_call_operand.vmem [shape: f32[4,512], index: 3, kind: output, shape index: {0}]
  %s4 = inlined_call_operand.vmem [shape: f32[2,1,128], index: 4, kind: output, shape index: {1}]
  %5 = xla_tuple %s3, %s4
  %s6 = sld [smem:[#allocation0]]
  $region53: #{flow_cell_forward.1} parent=0
    _
  %s8 = ssub.s32 1, %s6
  %s9 = scalar_select 0, %s8, %s6
  loop: start=0, step=1, limit=4
  $region2: #{flow_cell_forward.1} parent=0 // loop_pre_header
    _
  $region3: #{flow_cell_forward.1} parent=0 // loop_header
    %s11 = sphi 0, %s15
    %p12 = scmp.ge.s32.totalorder %s11, 4
    %s21 = sphi 0, %s23
    %s24 = sphi 0, %s21
    %s25 = sphi 0, %s24
    %s41 = sphi 0, %s25
    %s47 = sphi 0, %s49
    %s50 = sphi 0, %s47
    %s51 = sphi 0, %s50
    %s67 = sphi 0, %s51
    %s71 = sphi 0, %s71
    %s73 = sphi 0, %s71
    %s74 = sphi 0, %s73
    %s88 = sphi 0, %s74
    %s94 = sphi 0, %s96
    %s97 = sphi 0, %s94
    %s98 = sphi 0, %s97
    %s114 = sphi 0, %s98
    %s120 = sphi 0, %s122
    %s123 = sphi 0, %s120
    %s124 = sphi 0, %s123
    %s140 = sphi 0, %s124
  $region4: #{flow_cell_forward.1} parent=0 // loop_header_branch
    %14 = sbr.rel (%p12) target = $region8
  $region5: #{flow_cell_forward.1} parent=0 // loop_body
    %s16 = ssub.s32 %s11, 1
    %s17 = ssub.s32 %s11, 2
    %s18 = sadd.s32 %s11, 1
    %s19 = ssub.s32 %s11, %s18
    %p20 = scmp.eq.s32.totalorder %s19, 0
    %s22 = sadd.s32 %s21, 1
    %s23 = scalar_select %p20, %s21, %s22
    %p26 = pneg %p20
    %p27 = scmp.eq.s32.totalorder %s11, 1
    %p28 = por %p26, %p27
    %p29 = scmp.ne.s32.totalorder %s21, %s24
    %p30 = scmp.eq.s32.totalorder %s11, 0
    %p31 = por %p29, %p30
    %p32 = scmp.ne.s32.totalorder %s21, %s24
    %p33 = scmp.eq.s32.totalorder %s16, 1
    %p34 = por %p32, %p33
    %p35 = scmp.ne.s32.totalorder %s24, %s25
    %p36 = scmp.eq.s32.totalorder %s16, 0
    %p37 = por %p35, %p36
    %p38 = scmp.ne.s32.totalorder %s24, %s25
    %p39 = scmp.eq.s32.totalorder %s17, 1
    %p40 = por %p38, %p39
    %p42 = scmp.ne.s32.totalorder %s25, %s41
    %p43 = scmp.eq.s32.totalorder %s17, 0
    %p44 = por %p42, %p43
    %s45 = ssub.s32 %s11, %s18
    %p46 = scmp.eq.s32.totalorder %s45, 0
    %s48 = sadd.s32 %s47, 1
    %s49 = scalar_select %p46, %s47, %s48
    %p52 = pneg %p46
    %p53 = scmp.eq.s32.totalorder %s11, 1
    %p54 = por %p52, %p53
    %p55 = scmp.ne.s32.totalorder %s47, %s50
    %p56 = scmp.eq.s32.totalorder %s11, 0
    %p57 = por %p55, %p56
    %p58 = scmp.ne.s32.totalorder %s47, %s50
    %p59 = scmp.eq.s32.totalorder %s16, 1
    %p60 = por %p58, %p59
    %p61 = scmp.ne.s32.totalorder %s50, %s51
    %p62 = scmp.eq.s32.totalorder %s16, 0
    %p63 = por %p61, %p62
    %p64 = scmp.ne.s32.totalorder %s50, %s51
    %p65 = scmp.eq.s32.totalorder %s17, 1
    %p66 = por %p64, %p65
    %p68 = scmp.ne.s32.totalorder %s51, %s67
    %p69 = scmp.eq.s32.totalorder %s17, 0
    %p70 = por %p68, %p69
    %s72 = sadd.s32 %s71, 1
    %p75 = scmp.eq.s32.totalorder %s11, 1
    %p76 = scmp.ne.s32.totalorder %s71, %s73
    %p77 = scmp.eq.s32.totalorder %s11, 0
    %p78 = por %p76, %p77
    %p79 = scmp.ne.s32.totalorder %s71, %s73
    %p80 = scmp.eq.s32.totalorder %s16, 1
    %p81 = por %p79, %p80
    %p82 = scmp.ne.s32.totalorder %s73, %s74
    %p83 = scmp.eq.s32.totalorder %s16, 0
    %p84 = por %p82, %p83
    %p85 = scmp.ne.s32.totalorder %s73, %s74
    %p86 = scmp.eq.s32.totalorder %s17, 1
    %p87 = por %p85, %p86
    %p89 = scmp.ne.s32.totalorder %s74, %s88
    %p90 = scmp.eq.s32.totalorder %s17, 0
    %p91 = por %p89, %p90
    %s92 = ssub.s32 %s11, %s18
    %p93 = scmp.eq.s32.totalorder %s92, 0
    %s95 = sadd.s32 %s94, 1
    %s96 = scalar_select %p93, %s94, %s95
    %p99 = pneg %p93
    %p100 = scmp.eq.s32.totalorder %s11, 1
    %p101 = por %p99, %p100
    %p102 = scmp.ne.s32.totalorder %s94, %s97
    %p103 = scmp.eq.s32.totalorder %s11, 0
    %p104 = por %p102, %p103
    %p105 = scmp.ne.s32.totalorder %s94, %s97
    %p106 = scmp.eq.s32.totalorder %s16, 1
    %p107 = por %p105, %p106
    %p108 = scmp.ne.s32.totalorder %s97, %s98
    %p109 = scmp.eq.s32.totalorder %s16, 0
    %p110 = por %p108, %p109
    %p111 = scmp.ne.s32.totalorder %s97, %s98
    %p112 = scmp.eq.s32.totalorder %s17, 1
    %p113 = por %p111, %p112
    %p115 = scmp.ne.s32.totalorder %s98, %s114
    %p116 = scmp.eq.s32.totalorder %s17, 0
    %p117 = por %p115, %p116
    %s118 = ssub.s32 %s11, %s18
    %p119 = scmp.eq.s32.totalorder %s118, 0
    %s121 = sadd.s32 %s120, 1
    %s122 = scalar_select %p119, %s120, %s121
    %p125 = pneg %p119
    %p126 = scmp.eq.s32.totalorder %s11, 1
    %p127 = por %p125, %p126
    %p128 = scmp.ne.s32.totalorder %s120, %s123
    %p129 = scmp.eq.s32.totalorder %s11, 0
    %p130 = por %p128, %p129
    %p131 = scmp.ne.s32.totalorder %s120, %s123
    %p132 = scmp.eq.s32.totalorder %s16, 1
    %p133 = por %p131, %p132
    %p134 = scmp.ne.s32.totalorder %s123, %s124
    %p135 = scmp.eq.s32.totalorder %s16, 0
    %p136 = por %p134, %p135
    %p137 = scmp.ne.s32.totalorder %s123, %s124
    %p138 = scmp.eq.s32.totalorder %s17, 1
    %p139 = por %p137, %p138
    %p141 = scmp.ne.s32.totalorder %s124, %s140
    %p142 = scmp.eq.s32.totalorder %s17, 0
    %p143 = por %p141, %p142
    %p144 = scmp.le.s32.totalorder 1, %s11
    %p145 = scmp.lt.s32.totalorder %s11, 3
    %p146 = pnand %p144, %p145
    %p147 = pneg %p146
    // Predicated region
    $region9: #{flow_cell_forward.1} parent=5 // pred_check
      _
    $region10: #{flow_cell_forward.1} parent=5 // pred_check_branch
      %149 = sbr.rel (%p146) target = $region12
    $region11: #{flow_cell_forward.1} parent=5 // pred_region
      %s150 = ssub.s32 %s11, 1
      // Predicated region
      $region13: #{flow_cell_forward.1} parent=11 // pred_check
        %p151 = pneg %p84
      $region14: #{flow_cell_forward.1} parent=11 // pred_check_branch
        %153 = sbr.rel (%p151) target = $region16
      $region15: #{flow_cell_forward.1} parent=11 // pred_region
        _
      $region16: #{flow_cell_forward.1} parent=11 // pred_fallthru
        _
    $region12: #{flow_cell_forward.1} parent=5 // pred_fallthru
      _
    %p154 = scmp.lt.s32.totalorder %s11, 2
    // Predicated region
    $region17: #{flow_cell_forward.1} parent=5 // pred_check
      %p155 = pneg %p154
    $region18: #{flow_cell_forward.1} parent=5 // pred_check_branch
      %157 = sbr.rel (%p155) target = $region20
    $region19: #{flow_cell_forward.1} parent=5 // pred_region
      // Predicated region
      $region21: #{flow_cell_forward.1} parent=19 // pred_check
        %p158 = pneg %p31
      $region22: #{flow_cell_forward.1} parent=19 // pred_check_branch
        %160 = sbr.rel (%p158) target = $region24
      $region23: #{flow_cell_forward.1} parent=19 // pred_region
        %s161 = smul.u32 2, %s11
        %p162 = scmp.lt.s32.totalorder %s161, 3
        %s163 = scalar_select %p162, %s161, 3
        %s164 = smul.addr %s163, 4
        %s165 = scalar_lea.vmem %s0, %s164
        %s166 = smul.u32 2, %s11
      $region24: #{flow_cell_forward.1} parent=19 // pred_fallthru
        _
      // Predicated region
      $region25: #{flow_cell_forward.1} parent=19 // pred_check
        %p167 = pneg %p57
      $region26: #{flow_cell_forward.1} parent=19 // pred_check_branch
        %169 = sbr.rel (%p167) target = $region28
      $region27: #{flow_cell_forward.1} parent=19 // pred_region
        %s170 = smul.u32 2, %s11
        %p171 = scmp.lt.s32.totalorder %s170, 3
        %s172 = scalar_select %p171, %s170, 3
        %s173 = smul.addr %s172, 4
        %s174 = scalar_lea.vmem %s1, %s173
        %s175 = smul.u32 2, %s11
      $region28: #{flow_cell_forward.1} parent=19 // pred_fallthru
        _
    $region20: #{flow_cell_forward.1} parent=5 // pred_fallthru
      _
    %p176 = scmp.le.s32.totalorder 1, %s11
    %p177 = scmp.lt.s32.totalorder %s11, 3
    %p178 = pnand %p176, %p177
    %p179 = pneg %p178
    // Predicated region
    $region29: #{flow_cell_forward.1} parent=5 // pred_check
      _
    $region30: #{flow_cell_forward.1} parent=5 // pred_check_branch
      %181 = sbr.rel (%p178) target = $region32
    $region31: #{flow_cell_forward.1} parent=5 // pred_region
      %s182 = ssub.s32 %s11, 1
      %s183 = smul.u32 2, %s16
      %p184 = scmp.lt.s32.totalorder %s183, 3
      %s185 = scalar_select %p184, %s183, 3
      %s186 = smul.addr %s185, 4
      %s187 = scalar_lea.vmem %s0, %s186
      %p188 = pneg %p37
      %p189 = pneg %p34
      %s190 = smul.u32 2, %s16
      %p191 = scmp.lt.s32.totalorder %s190, 3
      %s192 = scalar_select %p191, %s190, 3
      %s193 = smul.addr %s192, 4
      %s194 = scalar_lea.vmem %s1, %s193
      %p195 = pneg %p63
      %p196 = pneg %p60
      %p197 = pneg %p84
      %p198 = pneg %p81
      %p199 = pneg %p110
      %p200 = pneg %p107
      %s201 = smul.u32 2, %s16
      %p202 = scmp.lt.s32.totalorder %s201, 3
      %s203 = scalar_select %p202, %s201, 3
      %s204 = smul.addr %s203, 4
      %s205 = scalar_lea.vmem %s3, %s204
      %p206 = pneg %p136
      %p207 = pneg %p133
      %p208 = scmp.lt.s32.totalorder %s16, 1
      %s209 = scalar_select %p208, %s16, 1
      %s210 = scalar_lea.vmem %s4, %s209
      %s211 = smul.u32 2, %s16
      %p212 = scmp.lt.s32.totalorder %s211, 3
      %s213 = scalar_select %p212, %s211, 3
      %s214 = smul.addr %s213, 4
      %s215 = scalar_lea.vmem %s0, %s214
      %s216 = smul.u32 2, %s16
      %s217 = smul.u32 2, %s16
      %p218 = scmp.lt.s32.totalorder %s217, 3
      %s219 = scalar_select %p218, %s217, 3
      %s220 = smul.addr %s219, 4
      %s221 = scalar_lea.vmem %s1, %s220
      %s222 = smul.u32 2, %s16
      %s223 = smul.u32 2, %s16
      %p224 = scmp.lt.s32.totalorder %s223, 3
      %s225 = scalar_select %p224, %s223, 3
      %s226 = smul.addr %s225, 4
      %s227 = scalar_lea.vmem %s3, %s226
      %s228 = smul.u32 2, %s16
      %p229 = scmp.lt.s32.totalorder %s16, 1
      %s230 = scalar_select %p229, %s16, 1
      %s231 = scalar_lea.vmem %s4, %s230
      %v232 = vld [vmem:[%s215] sm:$0xff]
      %v233 = vld [vmem:[%s221] sm:$0xff]
      %v234 = vld [vmem:[%s2 + $0x38] sm:$0xf]
      %236 = vset.pattern.permute.xlu0 0
      %237 = vperm.xlu0 %236, %v234
      %v238 = vpop.permute.xlu0 %237
      %v240 = vunpack.c.l.s4 839922192
      %v241 = vunpack.c.0.s8 %v240
      %v242 = vperm.slane %v238, %v241
      %v244 = vadd.f32 %v232, %v242
      %v245 = vld [vmem:[%s2 + $0x40] sm:$0xf]
      %v246 = vmul.f32 %v245, 1.442695
      %v247 = vpow.pop %v246
      %249 = vset.pattern.permute.xlu0 0
      %250 = vperm.xlu0 %249, %v247
      %v251 = vpop.permute.xlu0 %250
      %v253 = vunpack.c.l.s4 839922192
      %v254 = vunpack.c.0.s8 %v253
      %v255 = vperm.slane %v251, %v254
      %v257 = vmul.f32 %v244, %v255
      %v258 = vld [vmem:[%s2] sm:$0xf]
      %v259 = vld [vmem:[%s2 + $0x8] sm:$0xff]
      %v260 = vld [vmem:[%s2 + $0x10] sm:$0xff]
      %v261 = vld [vmem:[%s2 + $0x48] sm:$0xff]
      %v262 = vld [vmem:[%s2 + $0x50] sm:$0xff]
      %264 = vset.pattern.permute.xlu0 0
      %265 = vperm.xlu0 %264, %v261
      %v266 = vpop.permute.xlu0 %265
      %269 = vset.pattern.permute.xlu0 0
      %270 = vperm.xlu0 %269, %v262
      %v271 = vpop.permute.xlu0 %270
      %274 = vst [vmem:[#allocation1] ss:$2 sm:$0xff] %v233
      %v275 = vld.sshfl [vmem:[#allocation1] sm:$0xff pattern:$0x75316420]
      %v276 = vld.sshfl [vmem:[#allocation1 + $0x8] sm:$0xff pattern:$0x75316420]
      %vm277 = vcmask 31744
      %v279 = vsel %vm277, %v259, 0
      %v282 = vsel %vm277, %v260, 0
      %vm284 = vcmask 1043456
      %v285 = vsel %vm284, %v275, 0
      %v287 = vsel %vm284, %v276, 0
      %289 = vmatpush.msra.mxu0 0.0
      %290 = vmatpush.msra.mxu0 0.0
      %291 = vmatpush.msra.mxu0 0.0
      %292 = vmatpush.msra.mxu0 0.0
      %293 = vmatpush.msra.mxu0 0.0
      %294 = vmatpush.msra.mxu0 0.0
      %295 = vmatpush.msra.mxu0 0.0
      %296 = vmatpush.msra.mxu0 0.0
      %297 = vmatpush.msra.mxu0 0.0
      %298 = vmatpush.msra.mxu0 0.0
      %299 = vmatpush.msra.mxu0 0.0
      %300 = vmatpush.msra.mxu0 0.0
      %301 = vmatpush.msra.mxu0 0.0
      %302 = vmatpush.msra.mxu0 0.0
      %303 = vmatpush.msra.mxu0 0.0
      %304 = vmatpush.msra.mxu0 %v285
      %305 = vmatmul.f32.gmra.mxu0 %v279
      %v306 = vpop.f32.mrf.mxu0
      %v307 = vadd.f32 %v266, %v306
      %308 = vmatmul.f32.gmra.mxu0 %v282
      %v309 = vpop.f32.mrf.mxu0
      %v310 = vadd.f32 %v271, %v309
      %311 = vdwg.mxu0
      %312 = vmatpush.msra.mxu0 0.0
      %313 = vmatpush.msra.mxu0 0.0
      %314 = vmatpush.msra.mxu0 0.0
      %315 = vmatpush.msra.mxu0 0.0
      %316 = vmatpush.msra.mxu0 0.0
      %317 = vmatpush.msra.mxu0 0.0
      %318 = vmatpush.msra.mxu0 0.0
      %319 = vmatpush.msra.mxu0 0.0
      %320 = vmatpush.msra.mxu0 0.0
      %321 = vmatpush.msra.mxu0 0.0
      %322 = vmatpush.msra.mxu0 0.0
      %323 = vmatpush.msra.mxu0 0.0
      %324 = vmatpush.msra.mxu0 0.0
      %325 = vmatpush.msra.mxu0 0.0
      %326 = vmatpush.msra.mxu0 0.0
      %327 = vmatpush.msra.mxu0 %v287
      %328 = vmatmul.f32.gmra.mxu0 %v279
      %v329 = vpop.f32.mrf.mxu0
      %v330 = vadd.f32 %v266, %v329
      %331 = vmatmul.f32.gmra.mxu0 %v282
      %v332 = vpop.f32.mrf.mxu0
      %v333 = vadd.f32 %v271, %v332
      %334 = vdwg.mxu0
      %v335 = vmax.f32 %v307, 0.0
      %v336 = vmax.f32 %v330, 0.0
      %v337 = vmax.f32 %v310, 0.0
      %v338 = vmax.f32 %v333, 0.0
      %v339 = vld [vmem:[%s2 + $0x18] sm:$0xff]
      %v340 = vld [vmem:[%s2 + $0x58] sm:$0xff]
      %342 = vset.pattern.permute.xlu0 0
      %343 = vperm.xlu0 %342, %v340
      %v344 = vpop.permute.xlu0 %343
      %vm346 = vcmask 130048
      %v348 = vsel %vm346, %v339, 0
      %350 = vmatpush.msra.mxu0 0.0
      %351 = vmatpush.msra.mxu0 0.0
      %352 = vmatpush.msra.mxu0 0.0
      %353 = vmatpush.msra.mxu0 0.0
      %354 = vmatpush.msra.mxu0 0.0
      %355 = vmatpush.msra.mxu0 0.0
      %356 = vmatpush.msra.mxu0 0.0
      %357 = vmatpush.msra.mxu0 0.0
      %358 = vmatpush.msra.mxu0 0.0
      %359 = vmatpush.msra.mxu0 0.0
      %360 = vmatpush.msra.mxu0 0.0
      %361 = vmatpush.msra.mxu0 0.0
      %362 = vmatpush.msra.mxu0 0.0
      %363 = vmatpush.msra.mxu0 0.0
      %364 = vmatpush.msra.mxu0 %v337
      %365 = vmatpush.msra.mxu0 %v335
      %366 = vmatmul.f32.gmra.mxu0 %v348
      %v367 = vpop.f32.mrf.mxu0
      %v368 = vadd.f32 %v344, %v367
      %369 = vdwg.mxu0
      %370 = vmatpush.msra.mxu0 0.0
      %371 = vmatpush.msra.mxu0 0.0
      %372 = vmatpush.msra.mxu0 0.0
      %373 = vmatpush.msra.mxu0 0.0
      %374 = vmatpush.msra.mxu0 0.0
      %375 = vmatpush.msra.mxu0 0.0
      %376 = vmatpush.msra.mxu0 0.0
      %377 = vmatpush.msra.mxu0 0.0
      %378 = vmatpush.msra.mxu0 0.0
      %379 = vmatpush.msra.mxu0 0.0
      %380 = vmatpush.msra.mxu0 0.0
      %381 = vmatpush.msra.mxu0 0.0
      %382 = vmatpush.msra.mxu0 0.0
      %383 = vmatpush.msra.mxu0 0.0
      %384 = vmatpush.msra.mxu0 %v338
      %385 = vmatpush.msra.mxu0 %v336
      %386 = vmatmul.f32.gmra.mxu0 %v348
      %v387 = vpop.f32.mrf.mxu0
      %v388 = vadd.f32 %v344, %v387
      %389 = vdwg.mxu0
      %v390 = vtanh.pop %v368
      %v391 = vtanh.pop %v388
      %v392 = vld [vmem:[%s2 + $0x20] sm:$0xff]
      %v393 = vld [vmem:[%s2 + $0x28] sm:$0xff]
      %vm394 = vcmask 64512
      %v396 = vsel %vm394, %v392, 0
      %v399 = vsel %vm394, %v393, 0
      %401 = vmatpush.msra.mxu0 0.0
      %402 = vmatpush.msra.mxu0 0.0
      %403 = vmatpush.msra.mxu0 0.0
      %404 = vmatpush.msra.mxu0 0.0
      %405 = vmatpush.msra.mxu0 0.0
      %406 = vmatpush.msra.mxu0 0.0
      %407 = vmatpush.msra.mxu0 0.0
      %408 = vmatpush.msra.mxu0 0.0
      %409 = vmatpush.msra.mxu0 0.0
      %410 = vmatpush.msra.mxu0 0.0
      %411 = vmatpush.msra.mxu0 0.0
      %412 = vmatpush.msra.mxu0 0.0
      %413 = vmatpush.msra.mxu0 0.0
      %414 = vmatpush.msra.mxu0 0.0
      %415 = vmatpush.msra.mxu0 0.0
      %416 = vmatpush.msra.mxu0 %v390
      %417 = vmatmul.f32.gmra.mxu0 %v396
      %v418 = vpop.f32.mrf.mxu0
      %v419 = vadd.f32 0.0, %v418
      %420 = vmatmul.f32.gmra.mxu0 %v399
      %v421 = vpop.f32.mrf.mxu0
      %v422 = vadd.f32 0.0, %v421
      %423 = vdwg.mxu0
      %424 = vmatpush.msra.mxu0 0.0
      %425 = vmatpush.msra.mxu0 0.0
      %426 = vmatpush.msra.mxu0 0.0
      %427 = vmatpush.msra.mxu0 0.0
      %428 = vmatpush.msra.mxu0 0.0
      %429 = vmatpush.msra.mxu0 0.0
      %430 = vmatpush.msra.mxu0 0.0
      %431 = vmatpush.msra.mxu0 0.0
      %432 = vmatpush.msra.mxu0 0.0
      %433 = vmatpush.msra.mxu0 0.0
      %434 = vmatpush.msra.mxu0 0.0
      %435 = vmatpush.msra.mxu0 0.0
      %436 = vmatpush.msra.mxu0 0.0
      %437 = vmatpush.msra.mxu0 0.0
      %438 = vmatpush.msra.mxu0 0.0
      %439 = vmatpush.msra.mxu0 %v391
      %440 = vmatmul.f32.gmra.mxu0 %v396
      %v441 = vpop.f32.mrf.mxu0
      %v442 = vadd.f32 0.0, %v441
      %443 = vmatmul.f32.gmra.mxu0 %v399
      %v444 = vpop.f32.mrf.mxu0
      %v445 = vadd.f32 0.0, %v444
      %446 = vdwg.mxu0
      %v447 = vld [vmem:[%s2 + $0x60] sm:$0xf]
      %449 = vset.pattern.permute.xlu0 0
      %450 = vperm.xlu0 %449, %v447
      %v451 = vpop.permute.xlu0 %450
      %v453 = vadd.f32 %v419, %v451
      %v454 = vadd.f32 %v442, %v451
      %v455 = vld [vmem:[%s2 + $0x68] sm:$0xf]
      %457 = vset.pattern.permute.xlu0 0
      %458 = vperm.xlu0 %457, %v455
      %v459 = vpop.permute.xlu0 %458
      %v460 = vrot.slane %v459, 4
      %v462 = vadd.f32 %v419, %v460
      %v463 = vadd.f32 %v442, %v460
      %v464 = vadd.f32 %v462, 2.0
      %v465 = vadd.f32 %v463, 2.0
      %467 = vst [vmem:[#allocation1] ss:$2 sm:$0xff] %v257
      %v468 = vld.sshfl [vmem:[#allocation1] sm:$0xff pattern:$0x75316420]
      %v469 = vld.sshfl [vmem:[#allocation1 + $0x8] sm:$0xff pattern:$0x75316420]
      %v471 = vsel %vm277, %v258, 0
      %v473 = vsel %vm284, %v468, 0
      %v475 = vsel %vm284, %v469, 0
      %477 = vmatpush.msra.mxu0 0.0
      %478 = vmatpush.msra.mxu0 0.0
      %479 = vmatpush.msra.mxu0 0.0
      %480 = vmatpush.msra.mxu0 0.0
      %481 = vmatpush.msra.mxu0 0.0
      %482 = vmatpush.msra.mxu0 0.0
      %483 = vmatpush.msra.mxu0 0.0
      %484 = vmatpush.msra.mxu0 0.0
      %485 = vmatpush.msra.mxu0 0.0
      %486 = vmatpush.msra.mxu0 0.0
      %487 = vmatpush.msra.mxu0 0.0
      %488 = vmatpush.msra.mxu0 0.0
      %489 = vmatpush.msra.mxu0 0.0
      %490 = vmatpush.msra.mxu0 0.0
      %491 = vmatpush.msra.mxu0 0.0
      %492 = vmatpush.msra.mxu0 %v473
      %493 = vmatmul.f32.gmra.mxu0 %v471
      %v494 = vpop.f32.mrf.mxu0
      %v495 = vadd.f32 %v453, %v494
      %496 = vdwg.mxu0
      %497 = vmatpush.msra.mxu0 0.0
      %498 = vmatpush.msra.mxu0 0.0
      %499 = vmatpush.msra.mxu0 0.0
      %500 = vmatpush.msra.mxu0 0.0
      %501 = vmatpush.msra.mxu0 0.0
      %502 = vmatpush.msra.mxu0 0.0
      %503 = vmatpush.msra.mxu0 0.0
      %504 = vmatpush.msra.mxu0 0.0
      %505 = vmatpush.msra.mxu0 0.0
      %506 = vmatpush.msra.mxu0 0.0
      %507 = vmatpush.msra.mxu0 0.0
      %508 = vmatpush.msra.mxu0 0.0
      %509 = vmatpush.msra.mxu0 0.0
      %510 = vmatpush.msra.mxu0 0.0
      %511 = vmatpush.msra.mxu0 0.0
      %512 = vmatpush.msra.mxu0 %v475
      %513 = vmatmul.f32.gmra.mxu0 %v471
      %v514 = vpop.f32.mrf.mxu0
      %v515 = vadd.f32 %v454, %v514
      %516 = vdwg.mxu0
      %v517 = vxor.u32 %v464, 2147483648
      %v518 = vxor.u32 %v465, 2147483648
      %v519 = vmul.f32 %v517, 1.442695
      %v520 = vpow.pop %v519
      %v521 = vmul.f32 %v518, 1.442695
      %v522 = vpow.pop %v521
      %v523 = vadd.f32 %v520, 1.0
      %v524 = vadd.f32 %v522, 1.0
      %v525 = vrcp.pop %v523
      %v526 = vmul.f32 %v523, %v525
      %v527 = vsub.f32 1.0, %v526
      %v528 = vmul.f32 %v525, %v527
      %v529 = vadd.f32 %v525, %v528
      %vm530 = vweird.f32 %v523
      %vm531 = vweird.f32 %v525
      %vm532 = vmor %vm530, %vm531
      %v533 = vsel %vm532, %v525, %v529
      %v534 = vand.u32 2147483647, %v523
      %vm535 = vcmp.eq.f32.partialorder %v534, 8.507059e+37
      %v536 = vand.u32 %v523, 2147483648
      %v537 = vor.u32 1.1754944e-38, %v536
      %v538 = vsel %vm535, %v537, %v533
      %v539 = vmul.f32 1.0, %v538
      %v540 = vrcp.pop %v524
      %v541 = vmul.f32 %v524, %v540
      %v542 = vsub.f32 1.0, %v541
      %v543 = vmul.f32 %v540, %v542
      %v544 = vadd.f32 %v540, %v543
      %vm545 = vweird.f32 %v524
      %vm546 = vweird.f32 %v540
      %vm547 = vmor %vm545, %vm546
      %v548 = vsel %vm547, %v540, %v544
      %v549 = vand.u32 2147483647, %v524
      %vm550 = vcmp.eq.f32.partialorder %v549, 8.507059e+37
      %v551 = vand.u32 %v524, 2147483648
      %v552 = vor.u32 1.1754944e-38, %v551
      %v553 = vsel %vm550, %v552, %v548
      %v554 = vmul.f32 1.0, %v553
      %v557 = vrot.slane %v539, 4
      %v558 = vrot.slane %v554, 4
      %v561 = vmul.f32 %v495, %v557
      %v562 = vmul.f32 %v515, %v558
      %v563 = vmin.f32 %v464, 0.0
      %v564 = vmin.f32 %v465, 0.0
      %v565 = vand.u32 2147483647, %v464
      %v566 = vand.u32 2147483647, %v465
      %v567 = vsub.f32 0.0, %v565
      %v568 = vsub.f32 0.0, %v566
      %v569 = vmul.f32 %v567, 1.442695
      %v570 = vpow.pop %v569
      %v571 = vmul.f32 %v568, 1.442695
      %v572 = vpow.pop %v571
      %v573 = vadd.f32 %v570, 1.0
      %v574 = vadd.f32 %v572, 1.0
      %v575 = vlog2.pop %v573
      %v576 = vmul.f32 %v575, 0.6931472
      %v577 = vlog2.pop %v574
      %v578 = vmul.f32 %v577, 0.6931472
      %v579 = vsub.f32 %v563, %v576
      %v580 = vsub.f32 %v564, %v578
      %v581 = vld [vmem:[%s2 + $0x30] sm:$0xff]
      %v583 = vsel %vm277, %v581, 0
      %v586 = vsel %vm284, %v561, 0
      %v589 = vsel %vm284, %v562, 0
      %591 = vmatpush.msra.mxu0 0.0
      %592 = vmatpush.msra.mxu0 0.0
      %593 = vmatpush.msra.mxu0 0.0
      %594 = vmatpush.msra.mxu0 0.0
      %595 = vmatpush.msra.mxu0 0.0
      %596 = vmatpush.msra.mxu0 0.0
      %597 = vmatpush.msra.mxu0 0.0
      %598 = vmatpush.msra.mxu0 0.0
      %599 = vmatpush.msra.mxu0 0.0
      %600 = vmatpush.msra.mxu0 0.0
      %601 = vmatpush.msra.mxu0 0.0
      %602 = vmatpush.msra.mxu0 0.0
      %603 = vmatpush.msra.mxu0 0.0
      %604 = vmatpush.msra.mxu0 0.0
      %605 = vmatpush.msra.mxu0 0.0
      %606 = vmatpush.msra.mxu0 %v586
      %607 = vmatmul.f32.gmra.mxu0 %v583
      %v608 = vpop.f32.mrf.mxu0
      %v609 = vadd.f32 0.0, %v608
      %610 = vdwg.mxu0
      %611 = vmatpush.msra.mxu0 0.0
      %612 = vmatpush.msra.mxu0 0.0
      %613 = vmatpush.msra.mxu0 0.0
      %614 = vmatpush.msra.mxu0 0.0
      %615 = vmatpush.msra.mxu0 0.0
      %616 = vmatpush.msra.mxu0 0.0
      %617 = vmatpush.msra.mxu0 0.0
      %618 = vmatpush.msra.mxu0 0.0
      %619 = vmatpush.msra.mxu0 0.0
      %620 = vmatpush.msra.mxu0 0.0
      %621 = vmatpush.msra.mxu0 0.0
      %622 = vmatpush.msra.mxu0 0.0
      %623 = vmatpush.msra.mxu0 0.0
      %624 = vmatpush.msra.mxu0 0.0
      %625 = vmatpush.msra.mxu0 0.0
      %626 = vmatpush.msra.mxu0 %v589
      %627 = vmatmul.f32.gmra.mxu0 %v583
      %v628 = vpop.f32.mrf.mxu0
      %v629 = vadd.f32 0.0, %v628
      %630 = vdwg.mxu0
      %v631 = vadd.f32 %v609, %v422
      %v632 = vadd.f32 %v629, %v445
      %v633 = vld [vmem:[%s2 + $0x70] sm:$0xf]
      %635 = vset.pattern.permute.xlu0 0
      %636 = vperm.xlu0 %635, %v633
      %v637 = vpop.permute.xlu0 %636
      %v639 = vadd.f32 %v631, %v637
      %v640 = vadd.f32 %v632, %v637
      %v641 = vld [vmem:[%s2 + $0x78] sm:$0xf]
      %643 = vset.pattern.permute.xlu0 0
      %644 = vperm.xlu0 %643, %v641
      %v645 = vpop.permute.xlu0 %644
      %v646 = vrot.slane %v645, 4
      %v648 = vadd.f32 %v631, %v646
      %v649 = vadd.f32 %v632, %v646
      %v650 = vadd.f32 %v648, 2.0
      %v651 = vadd.f32 %v649, 2.0
      %v652 = vlaneseq
      %v653 = vshrl.u32 %v652, 7
      %vm654 = vcmp.ge.s32.totalorder %v653, 2
      %v655 = vsel %vm654, %v639, 0.0
      %v656 = vsel %vm654, %v640, 0.0
      %v657 = vadd.f32 %v561, %v655
      %v658 = vadd.f32 %v562, %v656
      %v659 = vxor.u32 %v650, 2147483648
      %v660 = vxor.u32 %v651, 2147483648
      %v661 = vmul.f32 %v659, 1.442695
      %v662 = vpow.pop %v661
      %v663 = vmul.f32 %v660, 1.442695
      %v664 = vpow.pop %v663
      %v665 = vadd.f32 %v662, 1.0
      %v666 = vadd.f32 %v664, 1.0
      %v667 = vrcp.pop %v665
      %v668 = vmul.f32 %v665, %v667
      %v669 = vsub.f32 1.0, %v668
      %v670 = vmul.f32 %v667, %v669
      %v671 = vadd.f32 %v667, %v670
      %vm672 = vweird.f32 %v665
      %vm673 = vweird.f32 %v667
      %vm674 = vmor %vm672, %vm673
      %v675 = vsel %vm674, %v667, %v671
      %v676 = vand.u32 2147483647, %v665
      %vm677 = vcmp.eq.f32.partialorder %v676, 8.507059e+37
      %v678 = vand.u32 %v665, 2147483648
      %v679 = vor.u32 1.1754944e-38, %v678
      %v680 = vsel %vm677, %v679, %v675
      %v681 = vmul.f32 1.0, %v680
      %v682 = vrcp.pop %v666
      %v683 = vmul.f32 %v666, %v682
      %v684 = vsub.f32 1.0, %v683
      %v685 = vmul.f32 %v682, %v684
      %v686 = vadd.f32 %v682, %v685
      %vm687 = vweird.f32 %v666
      %vm688 = vweird.f32 %v682
      %vm689 = vmor %vm687, %vm688
      %v690 = vsel %vm689, %v682, %v686
      %v691 = vand.u32 2147483647, %v666
      %vm692 = vcmp.eq.f32.partialorder %v691, 8.507059e+37
      %v693 = vand.u32 %v666, 2147483648
      %v694 = vor.u32 1.1754944e-38, %v693
      %v695 = vsel %vm692, %v694, %v690
      %v696 = vmul.f32 1.0, %v695
      %v699 = vrot.slane %v681, 4
      %v700 = vrot.slane %v696, 4
      %v703 = vsel %vm654, %v699, 1.0
      %v704 = vsel %vm654, %v700, 1.0
      %v705 = vmul.f32 %v657, %v703
      %v706 = vmul.f32 %v658, %v704
      %v707 = vmin.f32 %v650, 0.0
      %v708 = vmin.f32 %v651, 0.0
      %v709 = vand.u32 2147483647, %v650
      %v710 = vand.u32 2147483647, %v651
      %v711 = vsub.f32 0.0, %v709
      %v712 = vsub.f32 0.0, %v710
      %v713 = vmul.f32 %v711, 1.442695
      %v714 = vpow.pop %v713
      %v715 = vmul.f32 %v712, 1.442695
      %v716 = vpow.pop %v715
      %v717 = vadd.f32 %v714, 1.0
      %v718 = vadd.f32 %v716, 1.0
      %v719 = vlog2.pop %v717
      %v720 = vmul.f32 %v719, 0.6931472
      %v721 = vlog2.pop %v718
      %v722 = vmul.f32 %v721, 0.6931472
      %v723 = vsub.f32 %v707, %v720
      %v724 = vsub.f32 %v708, %v722
      %v727 = vrot.slane %v723, 4
      %v728 = vrot.slane %v724, 4
      %v731 = vsel %vm654, %v727, 0.0
      %v732 = vsel %vm654, %v728, 0.0
      %v735 = vrot.slane %v731, 4
      %v736 = vrot.slane %v732, 4
      %v739 = vadd.f32 %v579, %v735
      %v740 = vadd.f32 %v580, %v736
      %v743 = vrot.slane %v706, 4
      %v744 = vsel %vm284, %v705, %v743
      %746 = vst [vmem:[%s227] sm:$0xff] %v744
      %v747 = vlaneseq
      %v748 = vand.u32 %v747, 127
      %v751 = vrot.slane %v739, 4
      %v752 = vrot.slane %v740, 4
      %v755 = vsel %vm284, %v751, 0.0
      %v756 = vsel %vm284, %v752, 0.0
      %v757 = vadd.f32 %v755, %v756
      %758 = vadd.xlane.f32.xlu0 %v757
      %v759 = vpop.xlane.xlu0 %758
      %v760 = vrot.slane %v759, 4
      %v761 = vadd.f32 %v759, %v760
      %v762 = vrot.slane %v761, 2
      %v763 = vadd.f32 %v761, %v762
      %v764 = vrot.slane %v763, 1
      %v765 = vadd.f32 %v763, %v764
      %s766 = vtos %v765
      %vm767 = vcmp.eq.s32.totalorder %v748, 0
      %v768 = vstv %s766
      %v769 = vsel %vm767, %v768, 0.0
      %770 = vst [vmem:[%s231] sm:$0x1] %v769
      %s771 = smul.u32 2, %s16
      %p772 = scmp.lt.s32.totalorder %s771, 3
      %s773 = scalar_select %p772, %s771, 3
      %s774 = smul.addr %s773, 4
      %s775 = scalar_lea.vmem %s3, %s774
      %p776 = scmp.lt.s32.totalorder %s16, 1
      %s777 = scalar_select %p776, %s16, 1
      %s778 = scalar_lea.vmem %s4, %s777
      // Predicated region
      $region33: #{flow_cell_forward.1} parent=31 // pred_check
        %p779 = pneg %p107
      $region34: #{flow_cell_forward.1} parent=31 // pred_check_branch
        %781 = sbr.rel (%p779) target = $region36
      $region35: #{flow_cell_forward.1} parent=31 // pred_region
        %s782 = smul.u32 2, %s16
      $region36: #{flow_cell_forward.1} parent=31 // pred_fallthru
        _
      // Predicated region
      $region37: #{flow_cell_forward.1} parent=31 // pred_check
        %p783 = pneg %p133
      $region38: #{flow_cell_forward.1} parent=31 // pred_check_branch
        %785 = sbr.rel (%p783) target = $region40
      $region39: #{flow_cell_forward.1} parent=31 // pred_region
        _
      $region40: #{flow_cell_forward.1} parent=31 // pred_fallthru
        _
    $region32: #{flow_cell_forward.1} parent=5 // pred_fallthru
      _
    %p786 = scmp.le.s32.totalorder 2, %s11
    // Predicated region
    $region41: #{flow_cell_forward.1} parent=5 // pred_check
      %p787 = pneg %p786
    $region42: #{flow_cell_forward.1} parent=5 // pred_check_branch
      %789 = sbr.rel (%p787) target = $region44
    $region43: #{flow_cell_forward.1} parent=5 // pred_region
      %s790 = ssub.s32 %s11, 2
      // Predicated region
      $region45: #{flow_cell_forward.1} parent=43 // pred_check
        %p791 = pneg %p113
      $region46: #{flow_cell_forward.1} parent=43 // pred_check_branch
        %793 = sbr.rel (%p791) target = $region48
      $region47: #{flow_cell_forward.1} parent=43 // pred_region
        %s794 = smul.u32 2, %s17
        %p795 = scmp.lt.s32.totalorder %s794, 3
        %s796 = scalar_select %p795, %s794, 3
        %s797 = smul.addr %s796, 4
        %s798 = scalar_lea.vmem %s3, %s797
      $region48: #{flow_cell_forward.1} parent=43 // pred_fallthru
        _
      // Predicated region
      $region49: #{flow_cell_forward.1} parent=43 // pred_check
        %p799 = pneg %p139
      $region50: #{flow_cell_forward.1} parent=43 // pred_check_branch
        %801 = sbr.rel (%p799) target = $region52
      $region51: #{flow_cell_forward.1} parent=43 // pred_region
        %p802 = scmp.lt.s32.totalorder %s17, 1
        %s803 = scalar_select %p802, %s17, 1
        %s804 = scalar_lea.vmem %s4, %s803
      $region52: #{flow_cell_forward.1} parent=43 // pred_fallthru
        _
    $region44: #{flow_cell_forward.1} parent=5 // pred_fallthru
      _
  $region6: #{flow_cell_forward.1} parent=0 // loop_footer
    %s15 = sadd.s32 1, %s11
  $region7: #{flow_cell_forward.1} parent=0 // loop_footer_branch
    %10 = sbr.rel target = $region3
  $region8: #{flow_cell_forward.1} parent=0 // loop_exit
    _

</llo_original>
